<compile_context>
chip_gen: v5e
topology: v5e:2x2
jax: 0.10.0
libtpu: 0.0.40
codegen_flags: <defaults>
</compile_context>

<pallas_src>
import functools

import numpy as np
import jax
import jax.numpy as jnp
from jax import lax
from jax.experimental import pallas as pl
from jax.experimental.pallas import tpu as pltpu

_LANE = 128
_SUB = 8


def _focal_loss_kernel(pred_ref, tgt_ref, out_ref, *,
                       gamma, alpha01, alpha_full, num_classes):
    # pred_ref: (1, C, S_BLK, 128)   tgt_ref: (1, 1, S_BLK, 128)
    # out_ref:  (1, 1, 8, 128)  -- lane-dense per-block partial sum
    t = tgt_ref[0, 0]                                    # (S_BLK, 128) int32

    if num_classes == 2 and alpha01 is not None:
        # Fast path for binary classification (the default alpha=0.25 config).
        a0, a1 = alpha01
        x0 = pred_ref[0, 0].astype(jnp.float32)          # (S_BLK, 128)
        x1 = pred_ref[0, 1].astype(jnp.float32)
        d = x1 - x0                                      # logit1 - logit0
        # Other-minus-target logit; logpt = -softplus(z), numerically stable.
        z = jnp.where(t == 0, d, -d)
        logpt = -(jnp.maximum(z, 0.0) + jnp.log(1.0 + jnp.exp(-jnp.abs(z))))
        # Padded lanes (sentinel -1) and out-of-range classes get at = 0 so
        # they contribute nothing (PyTorch's gather would raise instead).
        at = jnp.where(t == 0, a0, jnp.where(t == 1, a1, 0.0))
    else:
        # General path: stable log-softmax over the leading class axis (all
        # elementwise across dense (S_BLK, 128) vregs), then an unrolled chain
        # of selects instead of a one-hot gather.
        x = pred_ref[0].astype(jnp.float32)              # (C, S_BLK, 128)
        m = jnp.max(x, axis=0)                           # (S_BLK, 128)
        lse = jnp.log(jnp.sum(jnp.exp(x - m[None]), axis=0)) + m
        logsm = x - lse[None]                            # (C, S_BLK, 128)
        logpt = jnp.zeros(t.shape, jnp.float32)
        at = jnp.zeros(t.shape, jnp.float32)
        for cls in range(num_classes):
            sel = t == cls
            logpt = jnp.where(sel, logsm[cls], logpt)
            if alpha_full is None:
                at = jnp.where(sel, 1.0, at)             # doubles as valid mask
            else:
                at = jnp.where(sel, float(alpha_full[cls]), at)

    scaled = logpt * at                                  # (S_BLK, 128)

    if gamma == 0:
        loss = scaled * (-100.0)
    else:
        pt = jnp.exp(logpt)                              # pt from pre-alpha logpt
        one_m = 1.0 - pt
        g_int = None
        if isinstance(gamma, int):
            g_int = gamma
        elif isinstance(gamma, float) and float(gamma).is_integer():
            g_int = int(gamma)
        if g_int is not None and 1 <= g_int <= 8:
            focal = one_m
            for _ in range(g_int - 1):
                focal = focal * one_m                    # repeated multiply, no pow
        else:
            focal = one_m ** gamma
        loss = focal * scaled * (-100.0)

    # Lane-dense partial: fold the sublane-block axis (S_BLK/8 groups of 8)
    # with elementwise adds; keep the final (8, 128) tile intact.
    s_blk = loss.shape[0]
    part = jnp.sum(loss.reshape(s_blk // _SUB, _SUB, _LANE), axis=0)  # (8, 128)
    out_ref[0, 0] = part


def focal_loss(pred, target, *, gamma=0, alpha=0.25, size_average=True,
               block_bytes=2 << 20):
    """Pallas TPU implementation of FocalLoss.forward.

    pred:   float array, NCHW (fast path) or (M, C); dtype preserved into kernel.
    target: int array of class indices, shape (N, H, W) (or (M,)).
    block_bytes: approx. bytes of `pred` moved per grid step (tune per chip:
                 ~1-3 MiB v5e, ~2-4 MiB v6e, ~4-8 MiB v7x).
    """
    if pred.ndim > 2:
        n, c = pred.shape[0], pred.shape[1]
        hw = int(np.prod(pred.shape[2:]))
        pred3 = pred.reshape(n, c, hw)                   # free reshape of NCHW
    else:
        # TODO(synk): the (M, C) path materializes a wrapper-side transpose
        # (one extra HBM pass of pred); NCHW is the fast path.
        c = pred.shape[1]
        n, hw = 1, pred.shape[0]
        pred3 = pred.T.reshape(1, c, hw)
    tgt3 = target.reshape(n, 1, hw).astype(jnp.int32)

    # Static alpha config (mirrors the PyTorch __init__).
    if alpha is None:
        alpha_vals = None
    elif isinstance(alpha, (float, int)):
        alpha_vals = (float(alpha), 1.0 - float(alpha))
    else:
        alpha_vals = tuple(float(v) for v in np.asarray(alpha).reshape(-1))

    use_fast = (c == 2) and (alpha_vals is not None) and (len(alpha_vals) == 2)
    alpha01 = alpha_vals if use_fast else None
    if use_fast or alpha_vals is None:
        alpha_full = None
    else:
        av = list(alpha_vals)[:c]
        # TODO(synk): PyTorch's alpha.gather(0, target) would error if alpha is
        # shorter than the class count; here short alpha is zero-padded.
        av = av + [0.0] * (c - len(av))
        alpha_full = tuple(av)

    # --- Spatial tiling: sublane rows of 128 lanes each, S_BLK rows per block.
    itemsize = jnp.dtype(pred3.dtype).itemsize
    s_blk = (int(block_bytes) // (c * _LANE * itemsize)) // _SUB * _SUB
    s_blk = max(_SUB, s_blk)
    rows_needed = -(-hw // _LANE)                        # ceil(hw / 128)
    rows_needed = -(-rows_needed // _SUB) * _SUB         # round up to mult of 8
    s_blk = min(s_blk, rows_needed)
    hw_blk = s_blk * _LANE
    hw_pad = -(-hw // hw_blk) * hw_blk

    if hw_pad != hw:
        # Pad pred with zeros (finite math) and target with the -1 sentinel.
        pred3 = jnp.pad(pred3, ((0, 0), (0, 0), (0, hw_pad - hw)))
        tgt3 = jnp.pad(tgt3, ((0, 0), (0, 0), (0, hw_pad - hw)),
                       constant_values=-1)

    rows = hw_pad // _LANE
    pred4 = pred3.reshape(n, c, rows, _LANE)             # free contiguous reshape
    tgt4 = tgt3.reshape(n, 1, rows, _LANE)
    num_s = rows // s_blk

    kernel = functools.partial(_focal_loss_kernel, gamma=gamma,
                               alpha01=alpha01, alpha_full=alpha_full,
                               num_classes=c)

    partials = pl.pallas_call(
        kernel,
        out_shape=jax.ShapeDtypeStruct((n, num_s, _SUB, _LANE), jnp.float32),
        grid_spec=pltpu.PrefetchScalarGridSpec(
            num_scalar_prefetch=0,
            grid=(n, num_s),
            in_specs=[
                pl.BlockSpec((1, c, s_blk, _LANE), lambda i, j: (i, 0, j, 0)),
                pl.BlockSpec((1, 1, s_blk, _LANE), lambda i, j: (i, 0, j, 0)),
            ],
            out_specs=pl.BlockSpec((1, 1, _SUB, _LANE),
                                   lambda i, j: (i, j, 0, 0)),
        ),
        compiler_params=pltpu.CompilerParams(
            dimension_semantics=("parallel", "parallel")),
    )(pred4, tgt4)

    loss_sum = jnp.sum(partials)
    if size_average:
        return loss_sum / (n * hw)
    return loss_sum


def _focal_loss_ref(pred, target, *, gamma=0, alpha=0.25, size_average=True):
    """Pure-JAX reference mirroring the PyTorch forward."""
    if pred.ndim > 2:
        n, c = pred.shape[0], pred.shape[1]
        pred = jnp.transpose(pred.reshape(n, c, -1), (0, 2, 1)).reshape(-1, c)
    tgt = target.reshape(-1).astype(jnp.int32)
    if alpha is None:
        alpha_vec = None
    elif isinstance(alpha, (float, int)):
        alpha_vec = jnp.array([float(alpha), 1.0 - float(alpha)], jnp.float32)
    else:
        alpha_vec = jnp.asarray(alpha, jnp.float32)
    logsm = jax.nn.log_softmax(pred.astype(jnp.float32), axis=1)
    logpt = jnp.take_along_axis(logsm, tgt[:, None], axis=1)[:, 0]
    pt = jnp.exp(logpt)
    if alpha_vec is not None:
        at = alpha_vec[tgt]
        logpt = logpt * at
    loss = -1.0 * (1.0 - pt) ** gamma * logpt * 100.0
    return loss.mean() if size_average else loss.sum()


if __name__ == "__main__":
    key = jax.random.PRNGKey(0)
    k1, k2, k3, k4 = jax.random.split(key, 4)

    # Test 1: default config — binary classification, gamma=0, alpha=0.25 (fast path).
    N, C, H, W = 2, 2, 16, 16
    pred = jax.random.normal(k1, (N, C, H, W), dtype=jnp.float32)
    target = jax.random.randint(k2, (N, H, W), 0, C, dtype=jnp.int32)
    out = jax.block_until_ready(focal_loss(pred, target,
                                           gamma=0, alpha=0.25, size_average=True))
    ref = _focal_loss_ref(pred, target, gamma=0, alpha=0.25, size_average=True)
    assert jnp.allclose(out, ref, rtol=1e-5, atol=1e-5), (out, ref)

    # Test 2: multi-class alpha list, gamma=2 (general path + focal factor).
    C2 = 4
    alpha_list = [0.1, 0.2, 0.3, 0.4]
    pred2 = jax.random.normal(k3, (N, C2, H, W), dtype=jnp.float32)
    target2 = jax.random.randint(k4, (N, H, W), 0, C2, dtype=jnp.int32)
    out2 = jax.block_until_ready(focal_loss(pred2, target2,
                                            gamma=2, alpha=alpha_list,
                                            size_average=True))
    ref2 = _focal_loss_ref(pred2, target2, gamma=2, alpha=alpha_list,
                           size_average=True)
    assert jnp.allclose(out2, ref2, rtol=1e-5, atol=1e-5), (out2, ref2)

    print("KERNEL_OK")
</pallas_src>

<mosaic_0001>
module attributes {stable_mosaic.version = 11 : i64} {
  func.func @_focal_loss_kernel(%arg0: i32, %arg1: i32, %arg2: memref<1x2x8x128xf32, #tpu.memory_space<vmem>>, %arg3: memref<1x1x8x128xi32, #tpu.memory_space<vmem>>, %arg4: memref<1x1x8x128xf32, #tpu.memory_space<vmem>>) attributes {dimension_semantics = [#tpu.dimension_semantics<parallel>, #tpu.dimension_semantics<parallel>], iteration_bounds = array<i64: 2, 1>, scalar_prefetch = 0 : i64, scratch_operands = 0 : i64, tpu.core_type = #tpu.core_type<tc>, window_params = [{transform_indices = @transform_0, window_bounds = array<i64: 1, 2, 8, 128>}, {transform_indices = @transform_1, window_bounds = array<i64: 1, 1, 8, 128>}, {transform_indices = @transform_2, window_bounds = array<i64: 1, 1, 8, 128>}]} {
    %c0 = arith.constant 0 : index
    %c0_0 = arith.constant 0 : index
    %c0_1 = arith.constant 0 : index
    %c0_2 = arith.constant 0 : index
    %0 = vector.load %arg3[%c0, %c0_0, %c0_1, %c0_2] : memref<1x1x8x128xi32, #tpu.memory_space<vmem>>, vector<1x1x8x128xi32>
    %1 = vector.shape_cast %0 : vector<1x1x8x128xi32> to vector<8x128xi32>
    %c0_3 = arith.constant 0 : index
    %c0_4 = arith.constant 0 : index
    %c0_5 = arith.constant 0 : index
    %c0_6 = arith.constant 0 : index
    %2 = vector.load %arg2[%c0_3, %c0_4, %c0_5, %c0_6] : memref<1x2x8x128xf32, #tpu.memory_space<vmem>>, vector<1x1x8x128xf32>
    %3 = vector.shape_cast %2 : vector<1x1x8x128xf32> to vector<8x128xf32>
    %c0_7 = arith.constant 0 : index
    %c1 = arith.constant 1 : index
    %c0_8 = arith.constant 0 : index
    %c0_9 = arith.constant 0 : index
    %4 = vector.load %arg2[%c0_7, %c1, %c0_8, %c0_9] : memref<1x2x8x128xf32, #tpu.memory_space<vmem>>, vector<1x1x8x128xf32>
    %5 = vector.shape_cast %4 : vector<1x1x8x128xf32> to vector<8x128xf32>
    %6 = arith.subf %5, %3 : vector<8x128xf32>
    %c0_i32 = arith.constant 0 : i32
    %7 = vector.broadcast %c0_i32 : i32 to vector<8x128xi32>
    %8 = arith.cmpi eq, %1, %7 : vector<8x128xi32>
    %cst = arith.constant 0.000000e+00 : f32
    %9 = vector.broadcast %cst : f32 to vector<8x128xf32>
    %10 = arith.subf %9, %6 : vector<8x128xf32>
    %11 = arith.select %8, %6, %10 : vector<8x128xi1>, vector<8x128xf32>
    %cst_10 = arith.constant 0.000000e+00 : f32
    %12 = vector.broadcast %cst_10 : f32 to vector<8x128xf32>
    %13 = arith.maximumf %11, %12 : vector<8x128xf32>
    %14 = math.absf %11 : vector<8x128xf32>
    %cst_11 = arith.constant 0.000000e+00 : f32
    %15 = vector.broadcast %cst_11 : f32 to vector<8x128xf32>
    %16 = arith.subf %15, %14 : vector<8x128xf32>
    %17 = math.exp %16 : vector<8x128xf32>
    %cst_12 = arith.constant 1.000000e+00 : f32
    %18 = vector.broadcast %cst_12 : f32 to vector<8x128xf32>
    %19 = arith.addf %18, %17 : vector<8x128xf32>
    %20 = math.log %19 : vector<8x128xf32>
    %21 = arith.addf %13, %20 : vector<8x128xf32>
    %cst_13 = arith.constant 0.000000e+00 : f32
    %22 = vector.broadcast %cst_13 : f32 to vector<8x128xf32>
    %23 = arith.subf %22, %21 : vector<8x128xf32>
    %c0_i32_14 = arith.constant 0 : i32
    %24 = vector.broadcast %c0_i32_14 : i32 to vector<8x128xi32>
    %25 = arith.cmpi eq, %1, %24 : vector<8x128xi32>
    %c1_i32 = arith.constant 1 : i32
    %26 = vector.broadcast %c1_i32 : i32 to vector<8x128xi32>
    %27 = arith.cmpi eq, %1, %26 : vector<8x128xi32>
    %cst_15 = arith.constant 7.500000e-01 : f32
    %cst_16 = arith.constant 0.000000e+00 : f32
    %28 = vector.broadcast %cst_15 : f32 to vector<8x128xf32>
    %29 = vector.broadcast %cst_16 : f32 to vector<8x128xf32>
    %30 = arith.select %27, %28, %29 : vector<8x128xi1>, vector<8x128xf32>
    %cst_17 = arith.constant 2.500000e-01 : f32
    %31 = vector.broadcast %cst_17 : f32 to vector<8x128xf32>
    %32 = arith.select %25, %31, %30 : vector<8x128xi1>, vector<8x128xf32>
    %33 = arith.mulf %23, %32 : vector<8x128xf32>
    %cst_18 = arith.constant -1.000000e+02 : f32
    %34 = vector.broadcast %cst_18 : f32 to vector<8x128xf32>
    %35 = arith.mulf %33, %34 : vector<8x128xf32>
    %36 = vector.shape_cast %35 : vector<8x128xf32> to vector<1x8x128xf32>
    %cst_19 = arith.constant dense<0.000000e+00> : vector<8x128xf32>
    %37 = vector.multi_reduction <add>, %36, %cst_19 [0] : vector<1x8x128xf32> to vector<8x128xf32>
    %c0_20 = arith.constant 0 : index
    %c0_21 = arith.constant 0 : index
    %c0_22 = arith.constant 0 : index
    %c0_23 = arith.constant 0 : index
    %38 = vector.load %arg4[%c0_20, %c0_21, %c0_22, %c0_23] : memref<1x1x8x128xf32, #tpu.memory_space<vmem>>, vector<1x1x8x128xf32>
    %39 = vector.shape_cast %38 : vector<1x1x8x128xf32> to vector<8x128xf32>
    %40 = vector.shape_cast %37 : vector<8x128xf32> to vector<1x1x8x128xf32>
    tpu.vector_store %arg4[%c0_20, %c0_21, %c0_22, %c0_23], %40 {strides = array<i32>} : memref<1x1x8x128xf32, #tpu.memory_space<vmem>>, vector<1x1x8x128xf32>,
    return
  }
  func.func @transform_0(%arg0: i32, %arg1: i32) -> (i32, i32, i32, i32) {
    %c0_i32 = arith.constant 0 : i32
    %c0_i32_0 = arith.constant 0 : i32
    %c0_i32_1 = arith.constant 0 : i32
    return %arg0, %c0_i32, %arg1, %c0_i32_0 : i32, i32, i32, i32
  }
  func.func @transform_1(%arg0: i32, %arg1: i32) -> (i32, i32, i32, i32) {
    %c0_i32 = arith.constant 0 : i32
    %c0_i32_0 = arith.constant 0 : i32
    %c0_i32_1 = arith.constant 0 : i32
    return %arg0, %c0_i32, %arg1, %c0_i32_0 : i32, i32, i32, i32
  }
  func.func @transform_2(%arg0: i32, %arg1: i32) -> (i32, i32, i32, i32) {
    %c0_i32 = arith.constant 0 : i32
    %c0_i32_0 = arith.constant 0 : i32
    %c0_i32_1 = arith.constant 0 : i32
    return %arg0, %arg1, %c0_i32, %c0_i32_0 : i32, i32, i32, i32
  }
}

</mosaic_0001>

<llo_original>
// kernel: tpu_custom_call.1
$region0: #{tpu_custom_call.1}
  #allocation0 [shape = 'u32[]', space=smem, size = 0x4, offset = 0x4, fixed_abs, tag = 'smem constant byte address 0x4 - core index']
  #allocation1 [shape = 'u32[72,128]{1,0:T(1,128)}', space=vmem, size = 0x9000, scoped, tag = 'internal scratch']
  %s0 = inlined_call_operand.hbm [shape: f32[2,2,8,128], index: 0, kind: input, shape index: {}]
  %s1 = inlined_call_operand.hbm [shape: s32[2,1,8,128], index: 1, kind: input, shape index: {}]
  %s2 = inlined_call_operand.hbm [shape: f32[2,1,8,128], index: 2, kind: output, shape index: {}]
  %s3 = sld [smem:[#allocation0]]
  $region49: #{tpu_custom_call.1} parent=0
    _
  %s5 = ssub.s32 1, %s3
  %s6 = scalar_select 0, %s5, %s3
  $region1: #{tpu_custom_call.1} parent=0
    #allocation2 [shape = 'u8[16384]{0}', space=vmem, size = 0x4000, scoped, tag = 'input window, operand 0']
    #allocation3 [shape = 's32[2]{0}', space=sflag, size = 0x8, scoped, tag = 'scoped memory for tpu_custom_call.1']
    #allocation4 [shape = 's32[2]{0}', space=sflag, size = 0x8, scoped, tag = 'scoped memory for tpu_custom_call.1']
    #allocation5 [shape = 'u8[8192]{0}', space=vmem, size = 0x2000, scoped, tag = 'input window, operand 1']
    #allocation6 [shape = 's32[2]{0}', space=sflag, size = 0x8, scoped, tag = 'scoped memory for tpu_custom_call.1']
    #allocation7 [shape = 'u8[8192]{0}', space=vmem, size = 0x2000, scoped, tag = 'output window, operand 0']
    %7 = vsyncpa [#allocation3], 0
    %s8 = scalar_lea.sflag [#allocation3], 1
    %9 = vsyncpa %s8, 0
    %10 = vsyncpa [#allocation6], 0
    %s11 = scalar_lea.sflag [#allocation6], 1
    %12 = vsyncpa %s11, 0
    %13 = vsyncpa [#allocation4], 0
    %s14 = scalar_lea.sflag [#allocation4], 1
    %15 = vsyncpa %s14, 0
    loop: start=0, step=1, limit=4
    $region2: #{tpu_custom_call.1} parent=1 // loop_pre_header
      _
    $region3: #{tpu_custom_call.1} parent=1 // loop_header
      %s17 = sphi 0, %s21
      %p18 = scmp.ge.s32.totalorder %s17, 4
      %s24 = sphi 0, %s36
      %s25 = sphi 0, %s32
      %s26 = sphi 0, %s24
      %s27 = sphi 0, %s25
      %s28 = sphi 0, %s26
      %s29 = sphi 0, %s27
      %s41 = sphi 0, %s43
      %s44 = sphi 0, %s41
      %s45 = sphi 0, %s44
      %s61 = sphi 0, %s45
      %s69 = sphi 0, %s71
      %s72 = sphi 0, %s69
      %s73 = sphi 0, %s72
      %s89 = sphi 0, %s73
      %s97 = sphi 0, %s99
      %s100 = sphi 0, %s97
      %s101 = sphi 0, %s100
      %s117 = sphi 0, %s101
    $region4: #{tpu_custom_call.1} parent=1 // loop_header_branch
      %20 = sbr.rel (%p18) target = $region8
    $region5: #{tpu_custom_call.1} parent=1 // loop_body
      %s22 = ssub.s32 %s17, 1
      %s23 = ssub.s32 %s17, 2
      %s30 = sadd.s32 1, %s25
      %p31 = scmp.ge.s32.totalorder %s30, 1
      %s32 = scalar_select %p31, 0, %s30
      %s33 = sadd.s32 1, %s24
      %s34 = scalar_select %p31, %s33, %s24
      %p35 = scmp.ge.s32.totalorder %s34, 2
      %s36 = scalar_select %p35, 0, %s34
      %s37 = ssub.s32 %s24, %s36
      %s38 = ssub.s32 %s25, %s32
      %s39 = sor.u32 %s37, %s38
      %p40 = scmp.eq.s32.totalorder %s39, 0
      %s42 = sadd.s32 %s41, 1
      %s43 = scalar_select %p40, %s41, %s42
      %p46 = pneg %p40
      %p47 = scmp.eq.s32.totalorder %s17, 1
      %p48 = por %p46, %p47
      %p49 = scmp.ne.s32.totalorder %s41, %s44
      %p50 = scmp.eq.s32.totalorder %s17, 0
      %p51 = por %p49, %p50
      %p52 = scmp.ne.s32.totalorder %s41, %s44
      %p53 = scmp.eq.s32.totalorder %s22, 1
      %p54 = por %p52, %p53
      %p55 = scmp.ne.s32.totalorder %s44, %s45
      %p56 = scmp.eq.s32.totalorder %s22, 0
      %p57 = por %p55, %p56
      %p58 = scmp.ne.s32.totalorder %s44, %s45
      %p59 = scmp.eq.s32.totalorder %s23, 1
      %p60 = por %p58, %p59
      %p62 = scmp.ne.s32.totalorder %s45, %s61
      %p63 = scmp.eq.s32.totalorder %s23, 0
      %p64 = por %p62, %p63
      %s65 = ssub.s32 %s24, %s36
      %s66 = ssub.s32 %s25, %s32
      %s67 = sor.u32 %s65, %s66
      %p68 = scmp.eq.s32.totalorder %s67, 0
      %s70 = sadd.s32 %s69, 1
      %s71 = scalar_select %p68, %s69, %s70
      %p74 = pneg %p68
      %p75 = scmp.eq.s32.totalorder %s17, 1
      %p76 = por %p74, %p75
      %p77 = scmp.ne.s32.totalorder %s69, %s72
      %p78 = scmp.eq.s32.totalorder %s17, 0
      %p79 = por %p77, %p78
      %p80 = scmp.ne.s32.totalorder %s69, %s72
      %p81 = scmp.eq.s32.totalorder %s22, 1
      %p82 = por %p80, %p81
      %p83 = scmp.ne.s32.totalorder %s72, %s73
      %p84 = scmp.eq.s32.totalorder %s22, 0
      %p85 = por %p83, %p84
      %p86 = scmp.ne.s32.totalorder %s72, %s73
      %p87 = scmp.eq.s32.totalorder %s23, 1
      %p88 = por %p86, %p87
      %p90 = scmp.ne.s32.totalorder %s73, %s89
      %p91 = scmp.eq.s32.totalorder %s23, 0
      %p92 = por %p90, %p91
      %s93 = ssub.s32 %s24, %s36
      %s94 = ssub.s32 %s25, %s32
      %s95 = sor.u32 %s93, %s94
      %p96 = scmp.eq.s32.totalorder %s95, 0
      %s98 = sadd.s32 %s97, 1
      %s99 = scalar_select %p96, %s97, %s98
      %p102 = pneg %p96
      %p103 = scmp.eq.s32.totalorder %s17, 1
      %p104 = por %p102, %p103
      %p105 = scmp.ne.s32.totalorder %s97, %s100
      %p106 = scmp.eq.s32.totalorder %s17, 0
      %p107 = por %p105, %p106
      %p108 = scmp.ne.s32.totalorder %s97, %s100
      %p109 = scmp.eq.s32.totalorder %s22, 1
      %p110 = por %p108, %p109
      %p111 = scmp.ne.s32.totalorder %s100, %s101
      %p112 = scmp.eq.s32.totalorder %s22, 0
      %p113 = por %p111, %p112
      %p114 = scmp.ne.s32.totalorder %s100, %s101
      %p115 = scmp.eq.s32.totalorder %s23, 1
      %p116 = por %p114, %p115
      %p118 = scmp.ne.s32.totalorder %s101, %s117
      %p119 = scmp.eq.s32.totalorder %s23, 0
      %p120 = por %p118, %p119
      %p121 = scmp.le.s32.totalorder 1, %s17
      %p122 = scmp.lt.s32.totalorder %s17, 3
      %p123 = pnand %p121, %p122
      %p124 = pneg %p123
      // Predicated region
      $region9: #{tpu_custom_call.1} parent=5 // pred_check
        _
      $region10: #{tpu_custom_call.1} parent=5 // pred_check_branch
        %126 = sbr.rel (%p123) target = $region12
      $region11: #{tpu_custom_call.1} parent=5 // pred_region
        %s127 = ssub.s32 %s17, 1
      $region12: #{tpu_custom_call.1} parent=5 // pred_fallthru
        _
      %p128 = scmp.lt.s32.totalorder %s17, 2
      // Predicated region
      $region13: #{tpu_custom_call.1} parent=5 // pred_check
        %p129 = pneg %p128
      $region14: #{tpu_custom_call.1} parent=5 // pred_check_branch
        %131 = sbr.rel (%p129) target = $region16
      $region15: #{tpu_custom_call.1} parent=5 // pred_region
        // Predicated region
        $region17: #{tpu_custom_call.1} parent=15 // pred_check
          %p132 = pneg %p51
        $region18: #{tpu_custom_call.1} parent=15 // pred_check_branch
          %134 = sbr.rel (%p132) target = $region20
        $region19: #{tpu_custom_call.1} parent=15 // pred_region
          %s135 = sand.u32 %s41, 1
          %s136 = scalar_lea.sflag [#allocation3], %s135
          %s137 = sand.u32 %s41, 1
          %s138 = smul.addr %s137, 16
          %s139 = scalar_lea.vmem [#allocation2], %s138
          %141 = vsyncadd %s136, 0
          %s142 = smul.addr %s24, 2
          %s143 = sadd.s32 %s25, %s142
          %s144 = smul.addr %s143, 8
          %s145 = scalar_lea.hbm %s0, %s144
          %s146 = sshll.u32 %s145, 4
          %s147 = int_to_ptr.hbm [resolvable:$true] %s146
          %s148 = sshll.u32 %s139, 4
          %s149 = int_to_ptr.vmem [resolvable:$true] %s148
          %154 = dma.hbm_to_vmem [thread:$0]  %s147, 256, %s149, %s136, 128, 128, 8
        $region20: #{tpu_custom_call.1} parent=15 // pred_fallthru
          _
        // Predicated region
        $region21: #{tpu_custom_call.1} parent=15 // pred_check
          %p155 = pneg %p79
        $region22: #{tpu_custom_call.1} parent=15 // pred_check_branch
          %157 = sbr.rel (%p155) target = $region24
        $region23: #{tpu_custom_call.1} parent=15 // pred_region
          %s158 = sand.u32 %s69, 1
          %s159 = scalar_lea.sflag [#allocation6], %s158
          %s160 = sand.u32 %s69, 1
          %s161 = smul.addr %s160, 8
          %s162 = scalar_lea.vmem [#allocation5], %s161
          %164 = vsyncadd %s159, 0
          %s165 = sadd.s32 %s25, %s24
          %s166 = smul.addr %s165, 8
          %s167 = scalar_lea.hbm %s1, %s166
          %s169 = sshll.u32 %s167, 4
          %s170 = int_to_ptr.hbm [resolvable:$true] %s169
          %s171 = sshll.u32 %s162, 4
          %s172 = int_to_ptr.vmem [resolvable:$true] %s171
          %174 = dma.hbm_to_vmem [thread:$0]  %s170, 128, %s172, %s159
        $region24: #{tpu_custom_call.1} parent=15 // pred_fallthru
          _
      $region16: #{tpu_custom_call.1} parent=5 // pred_fallthru
        _
      %p175 = scmp.le.s32.totalorder 1, %s17
      %p176 = scmp.lt.s32.totalorder %s17, 3
      %p177 = pnand %p175, %p176
      %p178 = pneg %p177
      // Predicated region
      $region25: #{tpu_custom_call.1} parent=5 // pred_check
        _
      $region26: #{tpu_custom_call.1} parent=5 // pred_check_branch
        %180 = sbr.rel (%p177) target = $region28
      $region27: #{tpu_custom_call.1} parent=5 // pred_region
        %s181 = ssub.s32 %s17, 1
        %s182 = sand.u32 %s44, 1
        %s183 = scalar_lea.sflag [#allocation3], %s182
        %s184 = sand.u32 %s44, 1
        %s185 = smul.addr %s184, 16
        %s186 = scalar_lea.vmem [#allocation2], %s185
        // Predicated region
        $region29: #{tpu_custom_call.1} parent=27 // pred_check
          %p187 = pneg %p57
        $region30: #{tpu_custom_call.1} parent=27 // pred_check_branch
          %189 = sbr.rel (%p187) target = $region32
        $region31: #{tpu_custom_call.1} parent=27 // pred_region
          %191 = dma.done %s183, 256
        $region32: #{tpu_custom_call.1} parent=27 // pred_fallthru
          _
        %s192 = sand.u32 %s72, 1
        %s193 = scalar_lea.sflag [#allocation6], %s192
        %s194 = sand.u32 %s72, 1
        %s195 = smul.addr %s194, 8
        %s196 = scalar_lea.vmem [#allocation5], %s195
        // Predicated region
        $region33: #{tpu_custom_call.1} parent=27 // pred_check
          %p197 = pneg %p85
        $region34: #{tpu_custom_call.1} parent=27 // pred_check_branch
          %199 = sbr.rel (%p197) target = $region36
        $region35: #{tpu_custom_call.1} parent=27 // pred_region
          %201 = dma.done %s193, 128
        $region36: #{tpu_custom_call.1} parent=27 // pred_fallthru
          _
        %s202 = sand.u32 %s44, 1
        %s203 = scalar_lea.sflag [#allocation3], %s202
        %s204 = sand.u32 %s44, 1
        %s205 = smul.addr %s204, 16
        %s206 = scalar_lea.vmem [#allocation2], %s205
        %p207 = pneg %p57
        %p208 = pneg %p54
        %s209 = sand.u32 %s72, 1
        %s210 = scalar_lea.sflag [#allocation6], %s209
        %s211 = sand.u32 %s72, 1
        %s212 = smul.addr %s211, 8
        %s213 = scalar_lea.vmem [#allocation5], %s212
        %p214 = pneg %p85
        %p215 = pneg %p82
        %p216 = pneg %p113
        %p217 = pneg %p110
        %s218 = sand.u32 %s100, 1
        %s219 = scalar_lea.sflag [#allocation4], %s218
        %s220 = sand.u32 %s100, 1
        %s221 = smul.addr %s220, 8
        %s222 = scalar_lea.vmem [#allocation7], %s221
        %v223 = vld [vmem:[%s196] sm:$0xff]
        %v224 = vld [vmem:[%s186] sm:$0xff]
        %s225 = scalar_lea.vmem %s186, 8 [#allocation2]
        %v226 = vld [vmem:[%s225] sm:$0xff]
        %v227 = vsub.f32 %v226, %v224
        %vm228 = vcmp.eq.s32.totalorder %v223, 0
        %v229 = vsub.f32 0.0, %v227
        %v230 = vsel %vm228, %v227, %v229
        %v231 = vmax.f32 %v230, 0.0
        %v232 = vand.u32 2147483647, %v230
        %v233 = vsub.f32 0.0, %v232
        %v234 = vmul.f32 %v233, 1.442695
        %v235 = vpow.pop %v234
        %v236 = vadd.f32 %v235, 1.0
        %v237 = vlog2.pop %v236
        %v238 = vmul.f32 %v237, 0.6931472
        %v239 = vadd.f32 %v231, %v238
        %v240 = vsub.f32 0.0, %v239
        %vm241 = vcmp.eq.s32.totalorder %v223, 1
        %v242 = vsel %vm241, 0.75, 0.0
        %v243 = vsel %vm228, 0.25, %v242
        %v244 = vmul.f32 %v240, %v243
        %v245 = vmul.f32 %v244, -100.0
        %v246 = vadd.f32 %v245, 0.0
        %247 = vst [vmem:[%s222] sm:$0xff] %v246
        %s248 = sand.u32 %s100, 1
        %s249 = scalar_lea.sflag [#allocation4], %s248
        %s250 = sand.u32 %s100, 1
        %s251 = smul.addr %s250, 8
        %s252 = scalar_lea.vmem [#allocation7], %s251
        // Predicated region
        $region37: #{tpu_custom_call.1} parent=27 // pred_check
          %p253 = pneg %p110
        $region38: #{tpu_custom_call.1} parent=27 // pred_check_branch
          %255 = sbr.rel (%p253) target = $region40
        $region39: #{tpu_custom_call.1} parent=27 // pred_region
          %257 = vsyncadd %s249, 0
          %s258 = sadd.s32 %s27, %s26
          %s259 = smul.addr %s258, 8
          %s260 = scalar_lea.hbm %s2, %s259
          %s262 = sshll.u32 %s252, 4
          %s263 = int_to_ptr.vmem [resolvable:$true] %s262
          %s264 = sshll.u32 %s260, 4
          %s265 = int_to_ptr.hbm [resolvable:$true] %s264
          %267 = dma.vmem_to_hbm [thread:$0]  %s263, 128, %s265, %s249
        $region40: #{tpu_custom_call.1} parent=27 // pred_fallthru
          _
      $region28: #{tpu_custom_call.1} parent=5 // pred_fallthru
        _
      %p268 = scmp.le.s32.totalorder 2, %s17
      // Predicated region
      $region41: #{tpu_custom_call.1} parent=5 // pred_check
        %p269 = pneg %p268
      $region42: #{tpu_custom_call.1} parent=5 // pred_check_branch
        %271 = sbr.rel (%p269) target = $region44
      $region43: #{tpu_custom_call.1} parent=5 // pred_region
        %s272 = ssub.s32 %s17, 2
        // Predicated region
        $region45: #{tpu_custom_call.1} parent=43 // pred_check
          %p273 = pneg %p116
        $region46: #{tpu_custom_call.1} parent=43 // pred_check_branch
          %275 = sbr.rel (%p273) target = $region48
        $region47: #{tpu_custom_call.1} parent=43 // pred_region
          %s276 = sand.u32 %s101, 1
          %s277 = scalar_lea.sflag [#allocation4], %s276
          %s278 = sand.u32 %s101, 1
          %s279 = smul.addr %s278, 8
          %s280 = scalar_lea.vmem [#allocation7], %s279
          %282 = dma.done %s277, 128
        $region48: #{tpu_custom_call.1} parent=43 // pred_fallthru
          _
      $region44: #{tpu_custom_call.1} parent=5 // pred_fallthru
        _
    $region6: #{tpu_custom_call.1} parent=1 // loop_footer
      %s21 = sadd.s32 1, %s17
    $region7: #{tpu_custom_call.1} parent=1 // loop_footer_branch
      %16 = sbr.rel target = $region3
    $region8: #{tpu_custom_call.1} parent=1 // loop_exit
      _
    %283 = vsyncpa [#allocation3], 1
    %s284 = scalar_lea.sflag [#allocation3], 1
    %285 = vsyncpa %s284, 1
    %286 = vsyncpa [#allocation6], 1
    %s287 = scalar_lea.sflag [#allocation6], 1
    %288 = vsyncpa %s287, 1
    %289 = vsyncpa [#allocation4], 1
    %s290 = scalar_lea.sflag [#allocation4], 1
    %291 = vsyncpa %s290, 1

</llo_original>
